<compile_context>
chip_gen: v5e
topology: v5e:2x2
jax: 0.10.0
libtpu: 0.0.40
codegen_flags: <defaults>
</compile_context>

<pallas_src>
import functools

import jax
import jax.numpy as jnp
import numpy as np
from jax import lax
from jax.experimental import pallas as pl
from jax.experimental.pallas import tpu as pltpu

EPS = 0.001
GAMMA = 2.0
_LANES = 128


def _lane_sum(v, td):
    """(N, td) -> (N, 128) via tree of 128-lane-aligned chunk adds (pure VPU)."""
    chunks = [v[:, c * _LANES:(c + 1) * _LANES] for c in range(td // _LANES)]
    while len(chunks) > 1:
        nxt = [chunks[i] + chunks[i + 1] for i in range(0, len(chunks) - 1, 2)]
        if len(chunks) % 2:
            nxt.append(chunks[-1])
        chunks = nxt
    return chunks[0]


def _make_kernel(w_bce, w_dice, w_jacc, w_focal, n, d, td, d_total):
    """Bake the (static) loss weights and sizes into the kernel body."""
    inv_nd = 1.0 / float(n * d)
    inv_n = 1.0 / float(n)
    nsteps = d_total // td
    needs_mask = d_total != d

    def kernel(x_ref, t_ref, out_ref,
               acc_bce, acc_focal, acc_inter, acc_p, acc_t):
        k = pl.program_id(0)

        @pl.when(k == 0)
        def _init():
            for r in (acc_bce, acc_focal, acc_inter, acc_p, acc_t):
                r[...] = jnp.zeros_like(r)

        x = x_ref[...]                              # (n, td) f32 logits
        t = t_ref[...].astype(jnp.float32)          # (n, td) targets

        # sigmoid(x); clamp keeps exp() finite so approx reciprocal never sees inf
        xc = jnp.clip(x, -30.0, 30.0)
        p = pl.reciprocal(1.0 + jnp.exp(-xc), approx=True)

        # BCEWithLogits, stable form; log1p(exp(-|x|)) == -log(max(p, 1-p))
        bce_el = jnp.maximum(x, 0.0) - x * t - jnp.log(jnp.maximum(p, 1.0 - p))

        # FocalLoss(gamma=2) applied to probabilities z = p (mirrors the
        # PyTorch module feeding sigmoid(input) into a logits-form focal loss):
        #   max(-z, 0) == 0 since z in (0,1); exp(2*logsigmoid(a)) == sigmoid(a)^2
        z = p
        fl = z - z * t + jnp.log(1.0 + jnp.exp(-z))
        a = -z * (t * 2.0 - 1.0)
        q = pl.reciprocal(1.0 + jnp.exp(-a), approx=True)
        focal_el = (q * q) * fl

        pt = p * t

        if needs_mask:
            col = k * td + lax.broadcasted_iota(jnp.int32, (n, td), 1)
            m = (col < d).astype(jnp.float32)
            bce_el = bce_el * m
            focal_el = focal_el * m
            p = p * m          # t (and hence p*t) is already 0 in the padded tail

        acc_bce[...] += _lane_sum(bce_el, td)
        acc_focal[...] += _lane_sum(focal_el, td)
        acc_inter[...] += _lane_sum(pt, td)
        acc_p[...] += _lane_sum(p, td)
        acc_t[...] += _lane_sum(t, td)

        @pl.when(k == nsteps - 1)
        def _finalize():
            bce = jnp.sum(jnp.sum(acc_bce[...], axis=1, keepdims=True),
                          axis=0, keepdims=True) * inv_nd              # (1,1)
            focal = jnp.sum(jnp.sum(acc_focal[...], axis=1, keepdims=True),
                            axis=0, keepdims=True) * inv_nd            # (1,1)
            inter = jnp.sum(acc_inter[...], axis=1, keepdims=True)     # (n,1)
            psum = jnp.sum(acc_p[...], axis=1, keepdims=True)          # (n,1)
            tsum = jnp.sum(acc_t[...], axis=1, keepdims=True)          # (n,1)

            dice_scores = (2.0 * inter + EPS) / (psum + tsum + EPS)
            jacc_scores = (inter + EPS) / (psum + tsum - inter + EPS)
            dice = jnp.clip(jnp.sum(dice_scores, axis=0, keepdims=True) * inv_n,
                            0.0, 1.0)
            jacc = jnp.clip(jnp.sum(jacc_scores, axis=0, keepdims=True) * inv_n,
                            0.0, 1.0)

            loss = (w_bce * bce + w_focal * focal
                    + w_dice * (1.0 - dice) + w_jacc * (1.0 - jacc))

            lane = lax.broadcasted_iota(jnp.int32, (1, _LANES), 1)
            out = jnp.where(lane == 0, loss, jnp.zeros((1, _LANES), jnp.float32))
            out = jnp.where(lane == 1, bce, out)
            out = jnp.where(lane == 2, dice, out)
            out = jnp.where(lane == 3, jacc, out)
            out = jnp.where(lane == 4, focal, out)
            out_ref[...] = out

    return kernel


def _choose_tile(n, d_pad128):
    """Pick D-tile width: ~512 KiB of f32 logits per tile, 512 <= td <= 8192."""
    td = ((131072 // max(n, 1)) // 512) * 512
    td = max(512, min(8192, td))
    td = min(td, d_pad128)
    return max(_LANES, (td // _LANES) * _LANES)


@functools.partial(jax.jit, static_argnames=("weights", "target_dtype", "block_d"))
def bce_dice_jaccard_loss(logits, target, weights,
                          target_dtype=jnp.bfloat16, block_d=None):
    """weights: tuple of ((name, weight), ...) with names in {bce,dice,jacc,focal}."""
    wdict = dict(weights)
    n = logits.shape[0]
    d = int(np.prod(logits.shape[1:]))

    x = logits.reshape(n, d).astype(jnp.float32)
    # Binary {0,1} masks are exact in bf16 (halves target HBM traffic on v5e);
    # pass target_dtype=jnp.float32 for soft labels.
    t = target.reshape(n, d).astype(target_dtype)

    d_pad128 = ((d + _LANES - 1) // _LANES) * _LANES
    td = int(block_d) if block_d is not None else _choose_tile(n, d_pad128)
    d_total = ((d + td - 1) // td) * td
    if d_total != d:
        x = jnp.pad(x, ((0, 0), (0, d_total - d)))
        t = jnp.pad(t, ((0, 0), (0, d_total - d)))
    nsteps = d_total // td

    kernel = _make_kernel(float(wdict.get("bce", 0.0)),
                          float(wdict.get("dice", 0.0)),
                          float(wdict.get("jacc", 0.0)),
                          float(wdict.get("focal", 0.0)),
                          n, d, td, d_total)

    out = pl.pallas_call(
        kernel,
        out_shape=jax.ShapeDtypeStruct((1, _LANES), jnp.float32),
        grid_spec=pltpu.PrefetchScalarGridSpec(
            num_scalar_prefetch=0,
            grid=(nsteps,),
            in_specs=[pl.BlockSpec((n, td), lambda k: (0, k)),
                      pl.BlockSpec((n, td), lambda k: (0, k))],
            out_specs=pl.BlockSpec((1, _LANES), lambda k: (0, 0)),
            scratch_shapes=[pltpu.VMEM((n, _LANES), jnp.float32)] * 5),
        compiler_params=pltpu.CompilerParams(
            dimension_semantics=("arbitrary",),
            # Tiles are only a few MiB; 32 MiB is explicit headroom for
            # double-buffering on every generation (<= v7x's 64 MiB physical).
            vmem_limit_bytes=32 * 1024 * 1024),
    )(x, t)

    # TODO(synk): the PyTorch module stashes per-term values in self.values
    # (stateful bookkeeping); here we return them instead.
    values = {"bce": out[0, 1], "dice": out[0, 2],
              "jacc": out[0, 3], "focal": out[0, 4]}
    return out[0, 0], values


def _reference(logits, target, wdict):
    """Pure-JAX reference mirroring the PyTorch forward, for verification."""
    n = logits.shape[0]
    x = logits.reshape(n, -1).astype(jnp.float32)
    t = target.reshape(n, -1).astype(jnp.float32)
    p = jax.nn.sigmoid(x)

    bce = jnp.mean(jnp.maximum(x, 0.0) - x * t + jnp.log1p(jnp.exp(-jnp.abs(x))))

    z = p
    max_val = jnp.maximum(-z, 0.0)
    fl = z - z * t + max_val + jnp.log(jnp.exp(-max_val) + jnp.exp(-z - max_val))
    invprobs = jax.nn.log_sigmoid(-z * (t * 2.0 - 1.0))
    focal = jnp.mean(jnp.exp(invprobs * GAMMA) * fl)

    inter = jnp.sum(p * t, axis=1)
    psum = jnp.sum(p, axis=1)
    tsum = jnp.sum(t, axis=1)
    dice = jnp.clip(jnp.mean((2.0 * inter + EPS) / (psum + tsum + EPS)), 0.0, 1.0)
    jacc = jnp.clip(jnp.mean((inter + EPS) / (psum + tsum - inter + EPS)), 0.0, 1.0)

    terms = {"bce": bce, "focal": focal, "dice": dice, "jacc": jacc}
    loss = 0.0
    for k, v in wdict.items():
        if not v:
            continue
        val = terms[k]
        loss = loss + (v * val if k in ("bce", "focal") else v * (1.0 - val))
    return loss, terms


if __name__ == "__main__":
    key = jax.random.PRNGKey(0)
    weight_sets = [
        (("bce", 0.5), ("dice", 0.25), ("jacc", 0.25), ("focal", 1.0)),
        (("bce", 1.0), ("dice", 0.0), ("jacc", 0.5), ("focal", 0.0)),
    ]
    # NCHW, as the PyTorch module would receive.
    shapes = [
        (2, 4, 16, 16),   # D = 1024  -> single tile
        (2, 3, 64, 64),   # D = 12288 -> multi-step grid + tail masking
        (3, 1, 50, 50),   # D = 2500  -> odd sizes, lane padding + masking
    ]

    for i, shp in enumerate(shapes):
        k1, k2 = jax.random.split(jax.random.fold_in(key, i))
        logits = jax.random.normal(k1, shp, dtype=jnp.float32) * 2.0
        target = (jax.random.uniform(k2, shp) > 0.5).astype(jnp.float32)

        for weights in weight_sets:
            loss, values = bce_dice_jaccard_loss(logits, target, weights)
            loss = jax.block_until_ready(loss)

            ref_loss, ref_terms = _reference(logits, target, dict(weights))
            assert np.isfinite(float(loss)), (shp, weights)
            assert np.allclose(float(loss), float(ref_loss),
                               rtol=2e-3, atol=2e-3), \
                (shp, weights, float(loss), float(ref_loss))
            for name in ("bce", "dice", "jacc", "focal"):
                assert np.allclose(float(values[name]), float(ref_terms[name]),
                                   rtol=2e-3, atol=2e-3), \
                    (shp, name, float(values[name]), float(ref_terms[name]))

    print("KERNEL_OK")
</pallas_src>

<mosaic_0001>
module attributes {stable_mosaic.version = 11 : i64} {
  func.func @kernel(%arg0: i32, %arg1: memref<2x1024xf32, #tpu.memory_space<vmem>>, %arg2: memref<2x1024xbf16, #tpu.memory_space<vmem>>, %arg3: memref<1x128xf32, #tpu.memory_space<vmem>>, %arg4: memref<2x128xf32, #tpu.memory_space<vmem>>, %arg5: memref<2x128xf32, #tpu.memory_space<vmem>>, %arg6: memref<2x128xf32, #tpu.memory_space<vmem>>, %arg7: memref<2x128xf32, #tpu.memory_space<vmem>>, %arg8: memref<2x128xf32, #tpu.memory_space<vmem>>) attributes {dimension_semantics = [#tpu.dimension_semantics<arbitrary>], iteration_bounds = array<i64: 1>, scalar_prefetch = 0 : i64, scratch_operands = 5 : i64, tpu.core_type = #tpu.core_type<tc>, window_params = [{transform_indices = @transform_0, window_bounds = array<i64: 2, 1024>}, {transform_indices = @transform_1, window_bounds = array<i64: 2, 1024>}, {pipeline_mode = #tpu.pipeline_mode<synchronous>, transform_indices = @transform_2, window_bounds = array<i64: 1, 128>}]} {
    %c0_i32 = arith.constant 0 : i32
    %0 = arith.cmpi eq, %arg0, %c0_i32 : i32
    %1 = arith.extui %0 : i1 to i32
    %c0_i32_0 = arith.constant 0 : i32
    %2 = arith.cmpi ne, %1, %c0_i32_0 : i32
    scf.if %2 {
      %cst_38 = arith.constant 0.000000e+00 : f32
      %143 = vector.broadcast %cst_38 : f32 to vector<2x128xf32>
      %c0_39 = arith.constant 0 : index
      %c0_40 = arith.constant 0 : index
      %144 = vector.load %arg4[%c0_39, %c0_40] : memref<2x128xf32, #tpu.memory_space<vmem>>, vector<2x128xf32>
      tpu.vector_store %arg4[%c0_39, %c0_40], %143 {strides = array<i32>} : memref<2x128xf32, #tpu.memory_space<vmem>>, vector<2x128xf32>,
      %cst_41 = arith.constant 0.000000e+00 : f32
      %145 = vector.broadcast %cst_41 : f32 to vector<2x128xf32>
      %c0_42 = arith.constant 0 : index
      %c0_43 = arith.constant 0 : index
      %146 = vector.load %arg5[%c0_42, %c0_43] : memref<2x128xf32, #tpu.memory_space<vmem>>, vector<2x128xf32>
      tpu.vector_store %arg5[%c0_42, %c0_43], %145 {strides = array<i32>} : memref<2x128xf32, #tpu.memory_space<vmem>>, vector<2x128xf32>,
      %cst_44 = arith.constant 0.000000e+00 : f32
      %147 = vector.broadcast %cst_44 : f32 to vector<2x128xf32>
      %c0_45 = arith.constant 0 : index
      %c0_46 = arith.constant 0 : index
      %148 = vector.load %arg6[%c0_45, %c0_46] : memref<2x128xf32, #tpu.memory_space<vmem>>, vector<2x128xf32>
      tpu.vector_store %arg6[%c0_45, %c0_46], %147 {strides = array<i32>} : memref<2x128xf32, #tpu.memory_space<vmem>>, vector<2x128xf32>,
      %cst_47 = arith.constant 0.000000e+00 : f32
      %149 = vector.broadcast %cst_47 : f32 to vector<2x128xf32>
      %c0_48 = arith.constant 0 : index
      %c0_49 = arith.constant 0 : index
      %150 = vector.load %arg7[%c0_48, %c0_49] : memref<2x128xf32, #tpu.memory_space<vmem>>, vector<2x128xf32>
      tpu.vector_store %arg7[%c0_48, %c0_49], %149 {strides = array<i32>} : memref<2x128xf32, #tpu.memory_space<vmem>>, vector<2x128xf32>,
      %cst_50 = arith.constant 0.000000e+00 : f32
      %151 = vector.broadcast %cst_50 : f32 to vector<2x128xf32>
      %c0_51 = arith.constant 0 : index
      %c0_52 = arith.constant 0 : index
      %152 = vector.load %arg8[%c0_51, %c0_52] : memref<2x128xf32, #tpu.memory_space<vmem>>, vector<2x128xf32>
      tpu.vector_store %arg8[%c0_51, %c0_52], %151 {strides = array<i32>} : memref<2x128xf32, #tpu.memory_space<vmem>>, vector<2x128xf32>,
    } else {
    }
    %c0 = arith.constant 0 : index
    %c0_1 = arith.constant 0 : index
    %3 = vector.load %arg1[%c0, %c0_1] : memref<2x1024xf32, #tpu.memory_space<vmem>>, vector<2x1024xf32>
    %c0_2 = arith.constant 0 : index
    %c0_3 = arith.constant 0 : index
    %4 = vector.load %arg2[%c0_2, %c0_3] : memref<2x1024xbf16, #tpu.memory_space<vmem>>, vector<2x1024xbf16>
    %5 = arith.extf %4 : vector<2x1024xbf16> to vector<2x1024xf32>
    %cst = arith.constant -3.000000e+01 : f32
    %cst_4 = arith.constant 3.000000e+01 : f32
    %6 = vector.broadcast %cst : f32 to vector<2x1024xf32>
    %7 = arith.maximumf %6, %3 : vector<2x1024xf32>
    %8 = vector.broadcast %cst_4 : f32 to vector<2x1024xf32>
    %9 = arith.minimumf %8, %7 : vector<2x1024xf32>
    %cst_5 = arith.constant 0.000000e+00 : f32
    %10 = vector.broadcast %cst_5 : f32 to vector<2x1024xf32>
    %11 = arith.subf %10, %9 : vector<2x1024xf32>
    %12 = math.exp %11 : vector<2x1024xf32>
    %cst_6 = arith.constant 1.000000e+00 : f32
    %13 = vector.broadcast %cst_6 : f32 to vector<2x1024xf32>
    %14 = arith.addf %13, %12 : vector<2x1024xf32>
    %15 = tpu.reciprocal %14 {approx = true} : vector<2x1024xf32> -> vector<2x1024xf32>
    %cst_7 = arith.constant 0.000000e+00 : f32
    %16 = vector.broadcast %cst_7 : f32 to vector<2x1024xf32>
    %17 = arith.maximumf %3, %16 : vector<2x1024xf32>
    %18 = arith.mulf %3, %5 : vector<2x1024xf32>
    %19 = arith.subf %17, %18 : vector<2x1024xf32>
    %cst_8 = arith.constant 1.000000e+00 : f32
    %20 = vector.broadcast %cst_8 : f32 to vector<2x1024xf32>
    %21 = arith.subf %20, %15 : vector<2x1024xf32>
    %22 = arith.maximumf %15, %21 : vector<2x1024xf32>
    %23 = math.log %22 : vector<2x1024xf32>
    %24 = arith.subf %19, %23 : vector<2x1024xf32>
    %25 = arith.mulf %15, %5 : vector<2x1024xf32>
    %26 = arith.subf %15, %25 : vector<2x1024xf32>
    %cst_9 = arith.constant 0.000000e+00 : f32
    %27 = vector.broadcast %cst_9 : f32 to vector<2x1024xf32>
    %28 = arith.subf %27, %15 : vector<2x1024xf32>
    %29 = math.exp %28 : vector<2x1024xf32>
    %cst_10 = arith.constant 1.000000e+00 : f32
    %30 = vector.broadcast %cst_10 : f32 to vector<2x1024xf32>
    %31 = arith.addf %30, %29 : vector<2x1024xf32>
    %32 = math.log %31 : vector<2x1024xf32>
    %33 = arith.addf %26, %32 : vector<2x1024xf32>
    %cst_11 = arith.constant 0.000000e+00 : f32
    %34 = vector.broadcast %cst_11 : f32 to vector<2x1024xf32>
    %35 = arith.subf %34, %15 : vector<2x1024xf32>
    %cst_12 = arith.constant 2.000000e+00 : f32
    %36 = vector.broadcast %cst_12 : f32 to vector<2x1024xf32>
    %37 = arith.mulf %5, %36 : vector<2x1024xf32>
    %cst_13 = arith.constant 1.000000e+00 : f32
    %38 = vector.broadcast %cst_13 : f32 to vector<2x1024xf32>
    %39 = arith.subf %37, %38 : vector<2x1024xf32>
    %40 = arith.mulf %35, %39 : vector<2x1024xf32>
    %cst_14 = arith.constant 0.000000e+00 : f32
    %41 = vector.broadcast %cst_14 : f32 to vector<2x1024xf32>
    %42 = arith.subf %41, %40 : vector<2x1024xf32>
    %43 = math.exp %42 : vector<2x1024xf32>
    %cst_15 = arith.constant 1.000000e+00 : f32
    %44 = vector.broadcast %cst_15 : f32 to vector<2x1024xf32>
    %45 = arith.addf %44, %43 : vector<2x1024xf32>
    %46 = tpu.reciprocal %45 {approx = true} : vector<2x1024xf32> -> vector<2x1024xf32>
    %47 = arith.mulf %46, %46 : vector<2x1024xf32>
    %48 = arith.mulf %47, %33 : vector<2x1024xf32>
    %49 = arith.mulf %15, %5 : vector<2x1024xf32>
    %c0_16 = arith.constant 0 : index
    %c0_17 = arith.constant 0 : index
    %50 = vector.load %arg4[%c0_16, %c0_17] : memref<2x128xf32, #tpu.memory_space<vmem>>, vector<2x128xf32>
    %51 = vector.extract_strided_slice %24 {offsets = [0, 0], sizes = [2, 128], strides = [1, 1]} : vector<2x1024xf32> to vector<2x128xf32>
    %52 = vector.extract_strided_slice %24 {offsets = [0, 128], sizes = [2, 128], strides = [1, 1]} : vector<2x1024xf32> to vector<2x128xf32>
    %53 = vector.extract_strided_slice %24 {offsets = [0, 256], sizes = [2, 128], strides = [1, 1]} : vector<2x1024xf32> to vector<2x128xf32>
    %54 = vector.extract_strided_slice %24 {offsets = [0, 384], sizes = [2, 128], strides = [1, 1]} : vector<2x1024xf32> to vector<2x128xf32>
    %55 = vector.extract_strided_slice %24 {offsets = [0, 512], sizes = [2, 128], strides = [1, 1]} : vector<2x1024xf32> to vector<2x128xf32>
    %56 = vector.extract_strided_slice %24 {offsets = [0, 640], sizes = [2, 128], strides = [1, 1]} : vector<2x1024xf32> to vector<2x128xf32>
    %57 = vector.extract_strided_slice %24 {offsets = [0, 768], sizes = [2, 128], strides = [1, 1]} : vector<2x1024xf32> to vector<2x128xf32>
    %58 = vector.extract_strided_slice %24 {offsets = [0, 896], sizes = [2, 128], strides = [1, 1]} : vector<2x1024xf32> to vector<2x128xf32>
    %59 = arith.addf %51, %52 : vector<2x128xf32>
    %60 = arith.addf %53, %54 : vector<2x128xf32>
    %61 = arith.addf %55, %56 : vector<2x128xf32>
    %62 = arith.addf %57, %58 : vector<2x128xf32>
    %63 = arith.addf %59, %60 : vector<2x128xf32>
    %64 = arith.addf %61, %62 : vector<2x128xf32>
    %65 = arith.addf %63, %64 : vector<2x128xf32>
    %66 = arith.addf %50, %65 : vector<2x128xf32>
    %c0_18 = arith.constant 0 : index
    %c0_19 = arith.constant 0 : index
    %67 = vector.load %arg4[%c0_18, %c0_19] : memref<2x128xf32, #tpu.memory_space<vmem>>, vector<2x128xf32>
    tpu.vector_store %arg4[%c0_18, %c0_19], %66 {strides = array<i32>} : memref<2x128xf32, #tpu.memory_space<vmem>>, vector<2x128xf32>,
    %c0_20 = arith.constant 0 : index
    %c0_21 = arith.constant 0 : index
    %68 = vector.load %arg5[%c0_20, %c0_21] : memref<2x128xf32, #tpu.memory_space<vmem>>, vector<2x128xf32>
    %69 = vector.extract_strided_slice %48 {offsets = [0, 0], sizes = [2, 128], strides = [1, 1]} : vector<2x1024xf32> to vector<2x128xf32>
    %70 = vector.extract_strided_slice %48 {offsets = [0, 128], sizes = [2, 128], strides = [1, 1]} : vector<2x1024xf32> to vector<2x128xf32>
    %71 = vector.extract_strided_slice %48 {offsets = [0, 256], sizes = [2, 128], strides = [1, 1]} : vector<2x1024xf32> to vector<2x128xf32>
    %72 = vector.extract_strided_slice %48 {offsets = [0, 384], sizes = [2, 128], strides = [1, 1]} : vector<2x1024xf32> to vector<2x128xf32>
    %73 = vector.extract_strided_slice %48 {offsets = [0, 512], sizes = [2, 128], strides = [1, 1]} : vector<2x1024xf32> to vector<2x128xf32>
    %74 = vector.extract_strided_slice %48 {offsets = [0, 640], sizes = [2, 128], strides = [1, 1]} : vector<2x1024xf32> to vector<2x128xf32>
    %75 = vector.extract_strided_slice %48 {offsets = [0, 768], sizes = [2, 128], strides = [1, 1]} : vector<2x1024xf32> to vector<2x128xf32>
    %76 = vector.extract_strided_slice %48 {offsets = [0, 896], sizes = [2, 128], strides = [1, 1]} : vector<2x1024xf32> to vector<2x128xf32>
    %77 = arith.addf %69, %70 : vector<2x128xf32>
    %78 = arith.addf %71, %72 : vector<2x128xf32>
    %79 = arith.addf %73, %74 : vector<2x128xf32>
    %80 = arith.addf %75, %76 : vector<2x128xf32>
    %81 = arith.addf %77, %78 : vector<2x128xf32>
    %82 = arith.addf %79, %80 : vector<2x128xf32>
    %83 = arith.addf %81, %82 : vector<2x128xf32>
    %84 = arith.addf %68, %83 : vector<2x128xf32>
    %c0_22 = arith.constant 0 : index
    %c0_23 = arith.constant 0 : index
    %85 = vector.load %arg5[%c0_22, %c0_23] : memref<2x128xf32, #tpu.memory_space<vmem>>, vector<2x128xf32>
    tpu.vector_store %arg5[%c0_22, %c0_23], %84 {strides = array<i32>} : memref<2x128xf32, #tpu.memory_space<vmem>>, vector<2x128xf32>,
    %c0_24 = arith.constant 0 : index
    %c0_25 = arith.constant 0 : index
    %86 = vector.load %arg6[%c0_24, %c0_25] : memref<2x128xf32, #tpu.memory_space<vmem>>, vector<2x128xf32>
    %87 = vector.extract_strided_slice %49 {offsets = [0, 0], sizes = [2, 128], strides = [1, 1]} : vector<2x1024xf32> to vector<2x128xf32>
    %88 = vector.extract_strided_slice %49 {offsets = [0, 128], sizes = [2, 128], strides = [1, 1]} : vector<2x1024xf32> to vector<2x128xf32>
    %89 = vector.extract_strided_slice %49 {offsets = [0, 256], sizes = [2, 128], strides = [1, 1]} : vector<2x1024xf32> to vector<2x128xf32>
    %90 = vector.extract_strided_slice %49 {offsets = [0, 384], sizes = [2, 128], strides = [1, 1]} : vector<2x1024xf32> to vector<2x128xf32>
    %91 = vector.extract_strided_slice %49 {offsets = [0, 512], sizes = [2, 128], strides = [1, 1]} : vector<2x1024xf32> to vector<2x128xf32>
    %92 = vector.extract_strided_slice %49 {offsets = [0, 640], sizes = [2, 128], strides = [1, 1]} : vector<2x1024xf32> to vector<2x128xf32>
    %93 = vector.extract_strided_slice %49 {offsets = [0, 768], sizes = [2, 128], strides = [1, 1]} : vector<2x1024xf32> to vector<2x128xf32>
    %94 = vector.extract_strided_slice %49 {offsets = [0, 896], sizes = [2, 128], strides = [1, 1]} : vector<2x1024xf32> to vector<2x128xf32>
    %95 = arith.addf %87, %88 : vector<2x128xf32>
    %96 = arith.addf %89, %90 : vector<2x128xf32>
    %97 = arith.addf %91, %92 : vector<2x128xf32>
    %98 = arith.addf %93, %94 : vector<2x128xf32>
    %99 = arith.addf %95, %96 : vector<2x128xf32>
    %100 = arith.addf %97, %98 : vector<2x128xf32>
    %101 = arith.addf %99, %100 : vector<2x128xf32>
    %102 = arith.addf %86, %101 : vector<2x128xf32>
    %c0_26 = arith.constant 0 : index
    %c0_27 = arith.constant 0 : index
    %103 = vector.load %arg6[%c0_26, %c0_27] : memref<2x128xf32, #tpu.memory_space<vmem>>, vector<2x128xf32>
    tpu.vector_store %arg6[%c0_26, %c0_27], %102 {strides = array<i32>} : memref<2x128xf32, #tpu.memory_space<vmem>>, vector<2x128xf32>,
    %c0_28 = arith.constant 0 : index
    %c0_29 = arith.constant 0 : index
    %104 = vector.load %arg7[%c0_28, %c0_29] : memref<2x128xf32, #tpu.memory_space<vmem>>, vector<2x128xf32>
    %105 = vector.extract_strided_slice %15 {offsets = [0, 0], sizes = [2, 128], strides = [1, 1]} : vector<2x1024xf32> to vector<2x128xf32>
    %106 = vector.extract_strided_slice %15 {offsets = [0, 128], sizes = [2, 128], strides = [1, 1]} : vector<2x1024xf32> to vector<2x128xf32>
    %107 = vector.extract_strided_slice %15 {offsets = [0, 256], sizes = [2, 128], strides = [1, 1]} : vector<2x1024xf32> to vector<2x128xf32>
    %108 = vector.extract_strided_slice %15 {offsets = [0, 384], sizes = [2, 128], strides = [1, 1]} : vector<2x1024xf32> to vector<2x128xf32>
    %109 = vector.extract_strided_slice %15 {offsets = [0, 512], sizes = [2, 128], strides = [1, 1]} : vector<2x1024xf32> to vector<2x128xf32>
    %110 = vector.extract_strided_slice %15 {offsets = [0, 640], sizes = [2, 128], strides = [1, 1]} : vector<2x1024xf32> to vector<2x128xf32>
    %111 = vector.extract_strided_slice %15 {offsets = [0, 768], sizes = [2, 128], strides = [1, 1]} : vector<2x1024xf32> to vector<2x128xf32>
    %112 = vector.extract_strided_slice %15 {offsets = [0, 896], sizes = [2, 128], strides = [1, 1]} : vector<2x1024xf32> to vector<2x128xf32>
    %113 = arith.addf %105, %106 : vector<2x128xf32>
    %114 = arith.addf %107, %108 : vector<2x128xf32>
    %115 = arith.addf %109, %110 : vector<2x128xf32>
    %116 = arith.addf %111, %112 : vector<2x128xf32>
    %117 = arith.addf %113, %114 : vector<2x128xf32>
    %118 = arith.addf %115, %116 : vector<2x128xf32>
    %119 = arith.addf %117, %118 : vector<2x128xf32>
    %120 = arith.addf %104, %119 : vector<2x128xf32>
    %c0_30 = arith.constant 0 : index
    %c0_31 = arith.constant 0 : index
    %121 = vector.load %arg7[%c0_30, %c0_31] : memref<2x128xf32, #tpu.memory_space<vmem>>, vector<2x128xf32>
    tpu.vector_store %arg7[%c0_30, %c0_31], %120 {strides = array<i32>} : memref<2x128xf32, #tpu.memory_space<vmem>>, vector<2x128xf32>,
    %c0_32 = arith.constant 0 : index
    %c0_33 = arith.constant 0 : index
    %122 = vector.load %arg8[%c0_32, %c0_33] : memref<2x128xf32, #tpu.memory_space<vmem>>, vector<2x128xf32>
    %123 = vector.extract_strided_slice %5 {offsets = [0, 0], sizes = [2, 128], strides = [1, 1]} : vector<2x1024xf32> to vector<2x128xf32>
    %124 = vector.extract_strided_slice %5 {offsets = [0, 128], sizes = [2, 128], strides = [1, 1]} : vector<2x1024xf32> to vector<2x128xf32>
    %125 = vector.extract_strided_slice %5 {offsets = [0, 256], sizes = [2, 128], strides = [1, 1]} : vector<2x1024xf32> to vector<2x128xf32>
    %126 = vector.extract_strided_slice %5 {offsets = [0, 384], sizes = [2, 128], strides = [1, 1]} : vector<2x1024xf32> to vector<2x128xf32>
    %127 = vector.extract_strided_slice %5 {offsets = [0, 512], sizes = [2, 128], strides = [1, 1]} : vector<2x1024xf32> to vector<2x128xf32>
    %128 = vector.extract_strided_slice %5 {offsets = [0, 640], sizes = [2, 128], strides = [1, 1]} : vector<2x1024xf32> to vector<2x128xf32>
    %129 = vector.extract_strided_slice %5 {offsets = [0, 768], sizes = [2, 128], strides = [1, 1]} : vector<2x1024xf32> to vector<2x128xf32>
    %130 = vector.extract_strided_slice %5 {offsets = [0, 896], sizes = [2, 128], strides = [1, 1]} : vector<2x1024xf32> to vector<2x128xf32>
    %131 = arith.addf %123, %124 : vector<2x128xf32>
    %132 = arith.addf %125, %126 : vector<2x128xf32>
    %133 = arith.addf %127, %128 : vector<2x128xf32>
    %134 = arith.addf %129, %130 : vector<2x128xf32>
    %135 = arith.addf %131, %132 : vector<2x128xf32>
    %136 = arith.addf %133, %134 : vector<2x128xf32>
    %137 = arith.addf %135, %136 : vector<2x128xf32>
    %138 = arith.addf %122, %137 : vector<2x128xf32>
    %c0_34 = arith.constant 0 : index
    %c0_35 = arith.constant 0 : index
    %139 = vector.load %arg8[%c0_34, %c0_35] : memref<2x128xf32, #tpu.memory_space<vmem>>, vector<2x128xf32>
    tpu.vector_store %arg8[%c0_34, %c0_35], %138 {strides = array<i32>} : memref<2x128xf32, #tpu.memory_space<vmem>>, vector<2x128xf32>,
    %c0_i32_36 = arith.constant 0 : i32
    %140 = arith.cmpi eq, %arg0, %c0_i32_36 : i32
    %141 = arith.extui %140 : i1 to i32
    %c0_i32_37 = arith.constant 0 : i32
    %142 = arith.cmpi ne, %141, %c0_i32_37 : i32
    scf.if %142 {
      %c0_38 = arith.constant 0 : index
      %c0_39 = arith.constant 0 : index
      %143 = vector.load %arg4[%c0_38, %c0_39] : memref<2x128xf32, #tpu.memory_space<vmem>>, vector<2x128xf32>
      %cst_40 = arith.constant dense<0.000000e+00> : vector<2xf32>
      %144 = vector.multi_reduction <add>, %143, %cst_40 [1] : vector<2x128xf32> to vector<2xf32>
      %145 = vector.shape_cast %144 : vector<2xf32> to vector<2x1xf32>
      %cst_41 = arith.constant dense<0.000000e+00> : vector<1xf32>
      %146 = vector.multi_reduction <add>, %145, %cst_41 [0] : vector<2x1xf32> to vector<1xf32>
      %147 = vector.shape_cast %146 : vector<1xf32> to vector<1x1xf32>
      %cst_42 = arith.constant 4.8828125E-4 : f32
      %148 = vector.broadcast %cst_42 : f32 to vector<1x1xf32>
      %149 = arith.mulf %147, %148 : vector<1x1xf32>
      %c0_43 = arith.constant 0 : index
      %c0_44 = arith.constant 0 : index
      %150 = vector.load %arg5[%c0_43, %c0_44] : memref<2x128xf32, #tpu.memory_space<vmem>>, vector<2x128xf32>
      %cst_45 = arith.constant dense<0.000000e+00> : vector<2xf32>
      %151 = vector.multi_reduction <add>, %150, %cst_45 [1] : vector<2x128xf32> to vector<2xf32>
      %152 = vector.shape_cast %151 : vector<2xf32> to vector<2x1xf32>
      %cst_46 = arith.constant dense<0.000000e+00> : vector<1xf32>
      %153 = vector.multi_reduction <add>, %152, %cst_46 [0] : vector<2x1xf32> to vector<1xf32>
      %154 = vector.shape_cast %153 : vector<1xf32> to vector<1x1xf32>
      %cst_47 = arith.constant 4.8828125E-4 : f32
      %155 = vector.broadcast %cst_47 : f32 to vector<1x1xf32>
      %156 = arith.mulf %154, %155 : vector<1x1xf32>
      %c0_48 = arith.constant 0 : index
      %c0_49 = arith.constant 0 : index
      %157 = vector.load %arg6[%c0_48, %c0_49] : memref<2x128xf32, #tpu.memory_space<vmem>>, vector<2x128xf32>
      %cst_50 = arith.constant dense<0.000000e+00> : vector<2xf32>
      %158 = vector.multi_reduction <add>, %157, %cst_50 [1] : vector<2x128xf32> to vector<2xf32>
      %159 = vector.shape_cast %158 : vector<2xf32> to vector<2x1xf32>
      %c0_51 = arith.constant 0 : index
      %c0_52 = arith.constant 0 : index
      %160 = vector.load %arg7[%c0_51, %c0_52] : memref<2x128xf32, #tpu.memory_space<vmem>>, vector<2x128xf32>
      %cst_53 = arith.constant dense<0.000000e+00> : vector<2xf32>
      %161 = vector.multi_reduction <add>, %160, %cst_53 [1] : vector<2x128xf32> to vector<2xf32>
      %162 = vector.shape_cast %161 : vector<2xf32> to vector<2x1xf32>
      %c0_54 = arith.constant 0 : index
      %c0_55 = arith.constant 0 : index
      %163 = vector.load %arg8[%c0_54, %c0_55] : memref<2x128xf32, #tpu.memory_space<vmem>>, vector<2x128xf32>
      %cst_56 = arith.constant dense<0.000000e+00> : vector<2xf32>
      %164 = vector.multi_reduction <add>, %163, %cst_56 [1] : vector<2x128xf32> to vector<2xf32>
      %165 = vector.shape_cast %164 : vector<2xf32> to vector<2x1xf32>
      %cst_57 = arith.constant 2.000000e+00 : f32
      %166 = vector.broadcast %cst_57 : f32 to vector<2x1xf32>
      %167 = arith.mulf %166, %159 : vector<2x1xf32>
      %cst_58 = arith.constant 1.000000e-03 : f32
      %168 = vector.broadcast %cst_58 : f32 to vector<2x1xf32>
      %169 = arith.addf %167, %168 : vector<2x1xf32>
      %170 = arith.addf %162, %165 : vector<2x1xf32>
      %cst_59 = arith.constant 1.000000e-03 : f32
      %171 = vector.broadcast %cst_59 : f32 to vector<2x1xf32>
      %172 = arith.addf %170, %171 : vector<2x1xf32>
      %173 = arith.divf %169, %172 : vector<2x1xf32>
      %cst_60 = arith.constant 1.000000e-03 : f32
      %174 = vector.broadcast %cst_60 : f32 to vector<2x1xf32>
      %175 = arith.addf %159, %174 : vector<2x1xf32>
      %176 = arith.addf %162, %165 : vector<2x1xf32>
      %177 = arith.subf %176, %159 : vector<2x1xf32>
      %cst_61 = arith.constant 1.000000e-03 : f32
      %178 = vector.broadcast %cst_61 : f32 to vector<2x1xf32>
      %179 = arith.addf %177, %178 : vector<2x1xf32>
      %180 = arith.divf %175, %179 : vector<2x1xf32>
      %cst_62 = arith.constant dense<0.000000e+00> : vector<1xf32>
      %181 = vector.multi_reduction <add>, %173, %cst_62 [0] : vector<2x1xf32> to vector<1xf32>
      %182 = vector.shape_cast %181 : vector<1xf32> to vector<1x1xf32>
      %cst_63 = arith.constant 5.000000e-01 : f32
      %183 = vector.broadcast %cst_63 : f32 to vector<1x1xf32>
      %184 = arith.mulf %182, %183 : vector<1x1xf32>
      %cst_64 = arith.constant 0.000000e+00 : f32
      %cst_65 = arith.constant 1.000000e+00 : f32
      %185 = vector.broadcast %cst_64 : f32 to vector<1x1xf32>
      %186 = arith.maximumf %185, %184 : vector<1x1xf32>
      %187 = vector.broadcast %cst_65 : f32 to vector<1x1xf32>
      %188 = arith.minimumf %187, %186 : vector<1x1xf32>
      %cst_66 = arith.constant dense<0.000000e+00> : vector<1xf32>
      %189 = vector.multi_reduction <add>, %180, %cst_66 [0] : vector<2x1xf32> to vector<1xf32>
      %190 = vector.shape_cast %189 : vector<1xf32> to vector<1x1xf32>
      %cst_67 = arith.constant 5.000000e-01 : f32
      %191 = vector.broadcast %cst_67 : f32 to vector<1x1xf32>
      %192 = arith.mulf %190, %191 : vector<1x1xf32>
      %cst_68 = arith.constant 0.000000e+00 : f32
      %cst_69 = arith.constant 1.000000e+00 : f32
      %193 = vector.broadcast %cst_68 : f32 to vector<1x1xf32>
      %194 = arith.maximumf %193, %192 : vector<1x1xf32>
      %195 = vector.broadcast %cst_69 : f32 to vector<1x1xf32>
      %196 = arith.minimumf %195, %194 : vector<1x1xf32>
      %cst_70 = arith.constant 5.000000e-01 : f32
      %197 = vector.broadcast %cst_70 : f32 to vector<1x1xf32>
      %198 = arith.mulf %197, %149 : vector<1x1xf32>
      %cst_71 = arith.constant 1.000000e+00 : f32
      %199 = vector.broadcast %cst_71 : f32 to vector<1x1xf32>
      %200 = arith.mulf %199, %156 : vector<1x1xf32>
      %201 = arith.addf %198, %200 : vector<1x1xf32>
      %cst_72 = arith.constant 1.000000e+00 : f32
      %202 = vector.broadcast %cst_72 : f32 to vector<1x1xf32>
      %203 = arith.subf %202, %188 : vector<1x1xf32>
      %cst_73 = arith.constant 2.500000e-01 : f32
      %204 = vector.broadcast %cst_73 : f32 to vector<1x1xf32>
      %205 = arith.mulf %204, %203 : vector<1x1xf32>
      %206 = arith.addf %201, %205 : vector<1x1xf32>
      %cst_74 = arith.constant 1.000000e+00 : f32
      %207 = vector.broadcast %cst_74 : f32 to vector<1x1xf32>
      %208 = arith.subf %207, %196 : vector<1x1xf32>
      %cst_75 = arith.constant 2.500000e-01 : f32
      %209 = vector.broadcast %cst_75 : f32 to vector<1x1xf32>
      %210 = arith.mulf %209, %208 : vector<1x1xf32>
      %211 = arith.addf %206, %210 : vector<1x1xf32>
      %212 = tpu.iota {dimensions = array<i32: 1>} : vector<1x128xi32>
      %c0_i32_76 = arith.constant 0 : i32
      %213 = vector.broadcast %c0_i32_76 : i32 to vector<1x128xi32>
      %214 = arith.cmpi eq, %212, %213 : vector<1x128xi32>
      %cst_77 = arith.constant 0.000000e+00 : f32
      %215 = vector.broadcast %cst_77 : f32 to vector<1x128xf32>
      %216 = vector.shape_cast %211 : vector<1x1xf32> to vector<1x1xf32>
      %217 = vector.broadcast %216 : vector<1x1xf32> to vector<1x128xf32>
      %218 = arith.select %214, %217, %215 : vector<1x128xi1>, vector<1x128xf32>
      %c1_i32 = arith.constant 1 : i32
      %219 = vector.broadcast %c1_i32 : i32 to vector<1x128xi32>
      %220 = arith.cmpi eq, %212, %219 : vector<1x128xi32>
      %221 = vector.shape_cast %149 : vector<1x1xf32> to vector<1x1xf32>
      %222 = vector.broadcast %221 : vector<1x1xf32> to vector<1x128xf32>
      %223 = arith.select %220, %222, %218 : vector<1x128xi1>, vector<1x128xf32>
      %c2_i32 = arith.constant 2 : i32
      %224 = vector.broadcast %c2_i32 : i32 to vector<1x128xi32>
      %225 = arith.cmpi eq, %212, %224 : vector<1x128xi32>
      %226 = vector.shape_cast %188 : vector<1x1xf32> to vector<1x1xf32>
      %227 = vector.broadcast %226 : vector<1x1xf32> to vector<1x128xf32>
      %228 = arith.select %225, %227, %223 : vector<1x128xi1>, vector<1x128xf32>
      %c3_i32 = arith.constant 3 : i32
      %229 = vector.broadcast %c3_i32 : i32 to vector<1x128xi32>
      %230 = arith.cmpi eq, %212, %229 : vector<1x128xi32>
      %231 = vector.shape_cast %196 : vector<1x1xf32> to vector<1x1xf32>
      %232 = vector.broadcast %231 : vector<1x1xf32> to vector<1x128xf32>
      %233 = arith.select %230, %232, %228 : vector<1x128xi1>, vector<1x128xf32>
      %c4_i32 = arith.constant 4 : i32
      %234 = vector.broadcast %c4_i32 : i32 to vector<1x128xi32>
      %235 = arith.cmpi eq, %212, %234 : vector<1x128xi32>
      %236 = vector.shape_cast %156 : vector<1x1xf32> to vector<1x1xf32>
      %237 = vector.broadcast %236 : vector<1x1xf32> to vector<1x128xf32>
      %238 = arith.select %235, %237, %233 : vector<1x128xi1>, vector<1x128xf32>
      %c0_78 = arith.constant 0 : index
      %c0_79 = arith.constant 0 : index
      %239 = vector.load %arg3[%c0_78, %c0_79] : memref<1x128xf32, #tpu.memory_space<vmem>>, vector<1x128xf32>
      tpu.vector_store %arg3[%c0_78, %c0_79], %238 {strides = array<i32>} : memref<1x128xf32, #tpu.memory_space<vmem>>, vector<1x128xf32>,
    } else {
    }
    return
  }
  func.func @transform_0(%arg0: i32) -> (i32, i32) {
    %c0_i32 = arith.constant 0 : i32
    %c0_i32_0 = arith.constant 0 : i32
    return %c0_i32, %arg0 : i32, i32
  }
  func.func @transform_1(%arg0: i32) -> (i32, i32) {
    %c0_i32 = arith.constant 0 : i32
    %c0_i32_0 = arith.constant 0 : i32
    return %c0_i32, %arg0 : i32, i32
  }
  func.func @transform_2(%arg0: i32) -> (i32, i32) {
    %c0_i32 = arith.constant 0 : i32
    %c0_i32_0 = arith.constant 0 : i32
    %c0_i32_1 = arith.constant 0 : i32
    return %c0_i32, %c0_i32_0 : i32, i32
  }
}

</mosaic_0001>

<llo_original>
// kernel: bce_dice_jaccard_loss.1
$region0: #{bce_dice_jaccard_loss.1}
  #allocation0 [shape = 'u32[]', space=smem, size = 0x4, offset = 0x4, fixed_abs, tag = 'smem constant byte address 0x4 - core index']
  #allocation1 [shape = 'u32[72,128]{1,0:T(1,128)}', space=vmem, size = 0x9000, scoped, tag = 'internal scratch']
  #allocation2 [shape = 'f32[2,128]{1,0:T(2,128)}', space=vmem, size = 0x400, scoped, tag = 'scratch operand']
  #allocation3 [shape = 'f32[2,128]{1,0:T(2,128)}', space=vmem, size = 0x400, scoped, tag = 'scratch operand']
  #allocation4 [shape = 'f32[2,128]{1,0:T(2,128)}', space=vmem, size = 0x400, scoped, tag = 'scratch operand']
  #allocation5 [shape = 'f32[2,128]{1,0:T(2,128)}', space=vmem, size = 0x400, scoped, tag = 'scratch operand']
  #allocation6 [shape = 'f32[2,128]{1,0:T(2,128)}', space=vmem, size = 0x400, scoped, tag = 'scratch operand']
  %s0 = inlined_call_operand.vmem [shape: f32[2,1024], index: 0, kind: input, shape index: {}]
  %s1 = inlined_call_operand.vmem [shape: bf16[2,1024], index: 1, kind: input, shape index: {}]
  %s2 = inlined_call_operand.vmem [shape: f32[1,128], index: 2, kind: output, shape index: {}]
  %s3 = sld [smem:[#allocation0]]
  $region26: #{bce_dice_jaccard_loss.1} parent=0
    _
  %s5 = ssub.s32 1, %s3
  %s6 = scalar_select 0, %s5, %s3
  // Predicated region
  $region2: #{bce_dice_jaccard_loss.1} parent=0 // pred_check
    _
  $region3: #{bce_dice_jaccard_loss.1} parent=0 // pred_check_branch
    %8 = sbr.rel (0) target = $region5
  $region4: #{bce_dice_jaccard_loss.1} parent=0 // pred_region
    _
  $region5: #{bce_dice_jaccard_loss.1} parent=0 // pred_fallthru
    _
  // Predicated region
  $region6: #{bce_dice_jaccard_loss.1} parent=0 // pred_check
    _
  $region7: #{bce_dice_jaccard_loss.1} parent=0 // pred_check_branch
    %10 = sbr.rel (0) target = $region9
  $region8: #{bce_dice_jaccard_loss.1} parent=0 // pred_region
    _
  $region9: #{bce_dice_jaccard_loss.1} parent=0 // pred_fallthru
    _
  %p11 = scmp.eq.s32.totalorder 0, 0
  // Predicated region
  $region10: #{bce_dice_jaccard_loss.1} parent=0 // pred_check
    %p12 = pneg %p11
  $region11: #{bce_dice_jaccard_loss.1} parent=0 // pred_check_branch
    %14 = sbr.rel (%p12) target = $region13
  $region12: #{bce_dice_jaccard_loss.1} parent=0 // pred_region
    %15 = vst [vmem:[#allocation2] sm:$0x3] 0.0
    %16 = vst [vmem:[#allocation3] sm:$0x3] 0.0
    %17 = vst [vmem:[#allocation4] sm:$0x3] 0.0
    %18 = vst [vmem:[#allocation5] sm:$0x3] 0.0
    %19 = vst [vmem:[#allocation6] sm:$0x3] 0.0
  $region13: #{bce_dice_jaccard_loss.1} parent=0 // pred_fallthru
    _
  %v20 = vld [vmem:[%s0] sm:$0xff]
  %v21 = vld [vmem:[%s0 + $0x8] sm:$0xff]
  %v22 = vld [vmem:[%s1] sm:$0xff]
  %v23 = vunpack.c.l.bf16 %v22
  %v24 = vunpack.c.h.bf16 %v22
  %v25 = vmax.f32 %v20, -30.0
  %v26 = vmax.f32 %v21, -30.0
  %v27 = vmin.f32 %v25, 30.0
  %v28 = vmin.f32 %v26, 30.0
  %v29 = vsub.f32 0.0, %v27
  %v30 = vsub.f32 0.0, %v28
  %v31 = vmul.f32 %v29, 1.442695
  %v32 = vpow.pop %v31
  %v33 = vmul.f32 %v30, 1.442695
  %v34 = vpow.pop %v33
  %v35 = vadd.f32 %v32, 1.0
  %v36 = vadd.f32 %v34, 1.0
  %v37 = vrcp.pop %v35
  %v38 = vrcp.pop %v36
  %v39 = vmax.f32 %v20, 0.0
  %v40 = vmax.f32 %v21, 0.0
  %v41 = vmul.f32 %v20, %v23
  %v42 = vmul.f32 %v21, %v24
  %v43 = vsub.f32 %v39, %v41
  %v44 = vsub.f32 %v40, %v42
  %v45 = vsub.f32 1.0, %v37
  %v46 = vsub.f32 1.0, %v38
  %v47 = vmax.f32 %v37, %v45
  %v48 = vmax.f32 %v38, %v46
  %v49 = vlog2.pop %v47
  %v50 = vmul.f32 %v49, 0.6931472
  %v51 = vlog2.pop %v48
  %v52 = vmul.f32 %v51, 0.6931472
  %v53 = vsub.f32 %v43, %v50
  %v54 = vsub.f32 %v44, %v52
  %v55 = vmul.f32 %v37, %v23
  %v56 = vmul.f32 %v38, %v24
  %v57 = vsub.f32 %v37, %v55
  %v58 = vsub.f32 %v38, %v56
  %v59 = vsub.f32 0.0, %v37
  %v60 = vsub.f32 0.0, %v38
  %v61 = vmul.f32 %v59, 1.442695
  %v62 = vpow.pop %v61
  %v63 = vmul.f32 %v60, 1.442695
  %v64 = vpow.pop %v63
  %v65 = vadd.f32 %v62, 1.0
  %v66 = vadd.f32 %v64, 1.0
  %v67 = vlog2.pop %v65
  %v68 = vmul.f32 %v67, 0.6931472
  %v69 = vlog2.pop %v66
  %v70 = vmul.f32 %v69, 0.6931472
  %v71 = vadd.f32 %v57, %v68
  %v72 = vadd.f32 %v58, %v70
  %v73 = vmul.f32 %v23, 2.0
  %v74 = vmul.f32 %v24, 2.0
  %v75 = vsub.f32 %v73, 1.0
  %v76 = vsub.f32 %v74, 1.0
  %v77 = vmul.f32 %v59, %v75
  %v78 = vmul.f32 %v60, %v76
  %v79 = vsub.f32 0.0, %v77
  %v80 = vsub.f32 0.0, %v78
  %v81 = vmul.f32 %v79, 1.442695
  %v82 = vpow.pop %v81
  %v83 = vmul.f32 %v80, 1.442695
  %v84 = vpow.pop %v83
  %v85 = vadd.f32 %v82, 1.0
  %v86 = vadd.f32 %v84, 1.0
  %v87 = vrcp.pop %v85
  %v88 = vrcp.pop %v86
  %v89 = vmul.f32 %v87, %v87
  %v90 = vmul.f32 %v88, %v88
  %v91 = vmul.f32 %v89, %v71
  %v92 = vmul.f32 %v90, %v72
  %v93 = vld [vmem:[#allocation2] sm:$0x3]
  %v95 = vrot.slane %v53, 2
  %v97 = vadd.f32 %v53, %v95
  %v98 = vrot.slane %v53, 4
  %v100 = vrot.slane %v53, 6
  %v102 = vadd.f32 %v98, %v100
  %v104 = vrot.slane %v54, 2
  %v106 = vadd.f32 %v54, %v104
  %v107 = vrot.slane %v54, 4
  %v109 = vrot.slane %v54, 6
  %v111 = vadd.f32 %v107, %v109
  %v112 = vadd.f32 %v97, %v102
  %v113 = vadd.f32 %v106, %v111
  %v114 = vadd.f32 %v112, %v113
  %v115 = vadd.f32 %v93, %v114
  %116 = vst [vmem:[#allocation2] sm:$0x3] %v115
  %v117 = vld [vmem:[#allocation3] sm:$0x3]
  %v119 = vrot.slane %v91, 2
  %v121 = vadd.f32 %v91, %v119
  %v122 = vrot.slane %v91, 4
  %v124 = vrot.slane %v91, 6
  %v126 = vadd.f32 %v122, %v124
  %v128 = vrot.slane %v92, 2
  %v130 = vadd.f32 %v92, %v128
  %v131 = vrot.slane %v92, 4
  %v133 = vrot.slane %v92, 6
  %v135 = vadd.f32 %v131, %v133
  %v136 = vadd.f32 %v121, %v126
  %v137 = vadd.f32 %v130, %v135
  %v138 = vadd.f32 %v136, %v137
  %v139 = vadd.f32 %v117, %v138
  %140 = vst [vmem:[#allocation3] sm:$0x3] %v139
  %v141 = vld [vmem:[#allocation4] sm:$0x3]
  %v143 = vrot.slane %v55, 2
  %v145 = vadd.f32 %v55, %v143
  %v146 = vrot.slane %v55, 4
  %v148 = vrot.slane %v55, 6
  %v150 = vadd.f32 %v146, %v148
  %v152 = vrot.slane %v56, 2
  %v154 = vadd.f32 %v56, %v152
  %v155 = vrot.slane %v56, 4
  %v157 = vrot.slane %v56, 6
  %v159 = vadd.f32 %v155, %v157
  %v160 = vadd.f32 %v145, %v150
  %v161 = vadd.f32 %v154, %v159
  %v162 = vadd.f32 %v160, %v161
  %v163 = vadd.f32 %v141, %v162
  %164 = vst [vmem:[#allocation4] sm:$0x3] %v163
  %v165 = vld [vmem:[#allocation5] sm:$0x3]
  %v167 = vrot.slane %v37, 2
  %v169 = vadd.f32 %v37, %v167
  %v170 = vrot.slane %v37, 4
  %v172 = vrot.slane %v37, 6
  %v174 = vadd.f32 %v170, %v172
  %v176 = vrot.slane %v38, 2
  %v178 = vadd.f32 %v38, %v176
  %v179 = vrot.slane %v38, 4
  %v181 = vrot.slane %v38, 6
  %v183 = vadd.f32 %v179, %v181
  %v184 = vadd.f32 %v169, %v174
  %v185 = vadd.f32 %v178, %v183
  %v186 = vadd.f32 %v184, %v185
  %v187 = vadd.f32 %v165, %v186
  %188 = vst [vmem:[#allocation5] sm:$0x3] %v187
  %v189 = vld [vmem:[#allocation6] sm:$0x3]
  %v191 = vrot.slane %v23, 2
  %v193 = vadd.f32 %v23, %v191
  %v194 = vrot.slane %v23, 4
  %v196 = vrot.slane %v23, 6
  %v198 = vadd.f32 %v194, %v196
  %v200 = vrot.slane %v24, 2
  %v202 = vadd.f32 %v24, %v200
  %v203 = vrot.slane %v24, 4
  %v205 = vrot.slane %v24, 6
  %v207 = vadd.f32 %v203, %v205
  %v208 = vadd.f32 %v193, %v198
  %v209 = vadd.f32 %v202, %v207
  %v210 = vadd.f32 %v208, %v209
  %v211 = vadd.f32 %v189, %v210
  %212 = vst [vmem:[#allocation6] sm:$0x3] %v211
  // Predicated region
  $region14: #{bce_dice_jaccard_loss.1} parent=0 // pred_check
    %p213 = pneg %p11
  $region15: #{bce_dice_jaccard_loss.1} parent=0 // pred_check_branch
    %215 = sbr.rel (%p213) target = $region17
  $region16: #{bce_dice_jaccard_loss.1} parent=0 // pred_region
    %v216 = vld [vmem:[#allocation2] sm:$0x3]
    %vm217 = vcmask 1041408
    %v218 = vsel %vm217, %v216, 0.0
    %219 = vadd.xlane.f32.xlu0 %v218
    %v220 = vpop.xlane.xlu0 %219
    %v221 = vsel %vm217, %v220, 0.0
    %v222 = vrot.slane %v221, 4
    %v223 = vadd.f32 %v221, %v222
    %v224 = vrot.slane %v223, 2
    %v225 = vadd.f32 %v223, %v224
    %v226 = vrot.slane %v225, 1
    %v227 = vadd.f32 %v225, %v226
    %v228 = vmul.f32 %v227, 0.00048828125
    %v229 = vld [vmem:[#allocation3] sm:$0x3]
    %v230 = vsel %vm217, %v229, 0.0
    %231 = vadd.xlane.f32.xlu0 %v230
    %v232 = vpop.xlane.xlu0 %231
    %v233 = vsel %vm217, %v232, 0.0
    %v234 = vrot.slane %v233, 4
    %v235 = vadd.f32 %v233, %v234
    %v236 = vrot.slane %v235, 2
    %v237 = vadd.f32 %v235, %v236
    %v238 = vrot.slane %v237, 1
    %v239 = vadd.f32 %v237, %v238
    %v240 = vmul.f32 %v239, 0.00048828125
    %v241 = vld [vmem:[#allocation4] sm:$0x3]
    %v242 = vsel %vm217, %v241, 0.0
    %243 = vadd.xlane.f32.xlu0 %v242
    %v244 = vpop.xlane.xlu0 %243
    %v245 = vld [vmem:[#allocation5] sm:$0x3]
    %v246 = vsel %vm217, %v245, 0.0
    %247 = vadd.xlane.f32.xlu0 %v246
    %v248 = vpop.xlane.xlu0 %247
    %v249 = vld [vmem:[#allocation6] sm:$0x3]
    %v250 = vsel %vm217, %v249, 0.0
    %251 = vadd.xlane.f32.xlu0 %v250
    %v252 = vpop.xlane.xlu0 %251
    %v253 = vmul.f32 %v244, 2.0
    %v254 = vadd.f32 %v253, 0.001
    %v255 = vadd.f32 %v248, %v252
    %v256 = vadd.f32 %v255, 0.001
    %v257 = vrcp.pop %v256
    %v258 = vmul.f32 %v256, %v257
    %v259 = vsub.f32 1.0, %v258
    %v260 = vmul.f32 %v257, %v259
    %v261 = vadd.f32 %v257, %v260
    %vm262 = vweird.f32 %v256
    %vm263 = vweird.f32 %v257
    %vm264 = vmor %vm262, %vm263
    %v265 = vsel %vm264, %v257, %v261
    %v266 = vand.u32 2147483647, %v256
    %vm267 = vcmp.eq.f32.partialorder %v266, 8.507059e+37
    %v268 = vand.u32 %v256, 2147483648
    %v269 = vor.u32 1.1754944e-38, %v268
    %v270 = vsel %vm267, %v269, %v265
    %v271 = vmul.f32 %v254, %v270
    %v272 = vadd.f32 %v244, 0.001
    %v273 = vsub.f32 %v255, %v244
    %v274 = vadd.f32 %v273, 0.001
    %v275 = vrcp.pop %v274
    %v276 = vmul.f32 %v274, %v275
    %v277 = vsub.f32 1.0, %v276
    %v278 = vmul.f32 %v275, %v277
    %v279 = vadd.f32 %v275, %v278
    %vm280 = vweird.f32 %v274
    %vm281 = vweird.f32 %v275
    %vm282 = vmor %vm280, %vm281
    %v283 = vsel %vm282, %v275, %v279
    %v284 = vand.u32 2147483647, %v274
    %vm285 = vcmp.eq.f32.partialorder %v284, 8.507059e+37
    %v286 = vand.u32 %v274, 2147483648
    %v287 = vor.u32 1.1754944e-38, %v286
    %v288 = vsel %vm285, %v287, %v283
    %v289 = vmul.f32 %v272, %v288
    %v290 = vsel %vm217, %v271, 0.0
    %v291 = vrot.slane %v290, 4
    %v292 = vadd.f32 %v290, %v291
    %v293 = vrot.slane %v292, 2
    %v294 = vadd.f32 %v292, %v293
    %v295 = vrot.slane %v294, 1
    %v296 = vadd.f32 %v294, %v295
    %v297 = vmul.f32 %v296, 0.5
    %v298 = vmax.f32 %v297, 0.0
    %v299 = vmin.f32 %v298, 1.0
    %v300 = vsel %vm217, %v289, 0.0
    %v301 = vrot.slane %v300, 4
    %v302 = vadd.f32 %v300, %v301
    %v303 = vrot.slane %v302, 2
    %v304 = vadd.f32 %v302, %v303
    %v305 = vrot.slane %v304, 1
    %v306 = vadd.f32 %v304, %v305
    %v307 = vmul.f32 %v306, 0.5
    %v308 = vmax.f32 %v307, 0.0
    %v309 = vmin.f32 %v308, 1.0
    %v310 = vmul.f32 %v228, 0.5
    %v311 = vadd.f32 %v310, %v240
    %v312 = vsub.f32 1.0, %v299
    %v313 = vmul.f32 %v312, 0.25
    %v314 = vadd.f32 %v311, %v313
    %v315 = vsub.f32 1.0, %v309
    %v316 = vmul.f32 %v315, 0.25
    %v317 = vadd.f32 %v314, %v316
    %v318 = vlaneseq
    %v319 = vand.u32 %v318, 127
    %vm320 = vcmp.eq.s32.totalorder %v319, 0
    %v321 = vsel %vm320, %v317, 0.0
    %vm322 = vcmp.eq.s32.totalorder %v319, 1
    %v323 = vsel %vm322, %v228, %v321
    %vm324 = vcmp.eq.s32.totalorder %v319, 2
    %v325 = vsel %vm324, %v299, %v323
    %vm326 = vcmp.eq.s32.totalorder %v319, 3
    %v327 = vsel %vm326, %v309, %v325
    %vm328 = vcmp.eq.s32.totalorder %v319, 4
    %v329 = vsel %vm328, %v240, %v327
    %330 = vst [vmem:[%s2] sm:$0x1] %v329
  $region17: #{bce_dice_jaccard_loss.1} parent=0 // pred_fallthru
    _
  // Predicated region
  $region18: #{bce_dice_jaccard_loss.1} parent=0 // pred_check
    _
  $region19: #{bce_dice_jaccard_loss.1} parent=0 // pred_check_branch
    %332 = sbr.rel (0) target = $region21
  $region20: #{bce_dice_jaccard_loss.1} parent=0 // pred_region
    _
  $region21: #{bce_dice_jaccard_loss.1} parent=0 // pred_fallthru
    _
  // Predicated region
  $region22: #{bce_dice_jaccard_loss.1} parent=0 // pred_check
    _
  $region23: #{bce_dice_jaccard_loss.1} parent=0 // pred_check_branch
    %334 = sbr.rel (0) target = $region25
  $region24: #{bce_dice_jaccard_loss.1} parent=0 // pred_region
    _
  $region25: #{bce_dice_jaccard_loss.1} parent=0 // pred_fallthru
    _

</llo_original>
